<compile_context>
chip_gen: v7x
topology: tpu7x:2x2x1
jax: 0.10.0
libtpu: 0.0.40
codegen_flags: <defaults>
</compile_context>

<pallas_src>
import jax
import jax.numpy as jnp
from jax.experimental import pallas as pl
from jax.experimental.pallas import tpu as pltpu

BN_EPS = 1e-8    # Dice(eps=1e-08)
ALPHA = 0.0      # Dice(alpha=0.0)
LANE = 128
SUBLANE = 8


def _round_up(x, m):
    return (x + m - 1) // m * m


def _make_mlp_kernel(num_hidden, alpha, compute_dtype):
    """Ref order: x, [W, packed(bias/scale/shift)] * num_hidden, Wf, bf, out."""

    def kernel(*refs):
        x_ref = refs[0]
        out_ref = refs[-1]
        idx = 1

        h = x_ref[...].astype(jnp.float32)
        for _ in range(num_hidden):
            w_ref, vec_ref = refs[idx], refs[idx + 1]
            idx += 2
            # Linear on the MXU, f32 accumulation.
            h = jnp.dot(h.astype(compute_dtype), w_ref[...],
                        preferred_element_type=jnp.float32)
            h = h + vec_ref[0:1, :]                      # bias
            # Dice: eval-mode BN folded to per-channel scale/shift on host.
            z = h * vec_ref[1:2, :] + vec_ref[2:3, :]
            p = jax.nn.sigmoid(z)
            if alpha == 0.0:
                h = p * h                                # (1-p)*alpha*h == 0
            else:
                h = p * h + (1.0 - p) * alpha * h
            # Dropout(p=0.1): inference mode -> identity.

        wf_ref, bf_ref = refs[idx], refs[idx + 1]
        out = jnp.dot(h.astype(compute_dtype), wf_ref[...],
                      preferred_element_type=jnp.float32) + bf_ref[...]
        out_ref[...] = out.astype(out_ref.dtype)

    return kernel


def mlp_layer_forward(x, hidden_params, final_params, *, tile_b=512,
                      compute_dtype=jnp.float32,
                      vmem_limit_bytes=48 * 1024 * 1024):
    """x: (B, D) f32.
    hidden_params: list of (W_t (d_in,d_out), b, gamma, beta, rmean, rvar), vectors (1,d_out).
    final_params: (Wf_t (d_hidden,1), bf (1,1)).  Returns (B, 1) f32.
    compute_dtype=jnp.bfloat16 halves weight DMA bytes / doubles MXU rate on v6e/v7x."""
    B, D = x.shape
    num_hidden = len(hidden_params)

    # ---- fold eval-mode BN + pad channel dims to the 128-lane width (host side) ----
    layer_inputs = []
    d_in_pad = D
    for (w, b, g, be, rm, rv) in hidden_params:
        din, dout = w.shape
        dout_pad = _round_up(dout, LANE)
        scale = g * jax.lax.rsqrt(rv + BN_EPS)          # (1, dout)
        shift = be - rm * scale                          # (1, dout)
        w_p = jnp.zeros((d_in_pad, dout_pad), jnp.float32).at[:din, :dout].set(w)
        vec = jnp.zeros((3, dout_pad), jnp.float32)
        vec = vec.at[0:1, :dout].set(b).at[1:2, :dout].set(scale).at[2:3, :dout].set(shift)
        layer_inputs.append(w_p.astype(compute_dtype))
        layer_inputs.append(vec)
        d_in_pad = dout_pad

    wf, bf = final_params
    dfi, dfo = wf.shape                                  # dfo == 1
    n_pad = _round_up(dfo, LANE)                         # lane-dense output slab
    wf_p = jnp.zeros((d_in_pad, n_pad), jnp.float32).at[:dfi, :dfo].set(wf)
    bf_p = jnp.zeros((1, n_pad), jnp.float32).at[:, :dfo].set(bf)
    layer_inputs += [wf_p.astype(compute_dtype), bf_p]

    # ---- batch tiling (grid over rows; weights resident across the grid) ----
    tile_b = max(SUBLANE, min(tile_b, _round_up(B, SUBLANE)))
    tile_b = _round_up(tile_b, SUBLANE)
    b_pad = _round_up(B, tile_b)
    if b_pad != B:
        x = jnp.pad(x, ((0, b_pad - B), (0, 0)))
    grid = (pl.cdiv(b_pad, tile_b),)

    def resident(arr):
        return pl.BlockSpec(arr.shape, lambda i: (0, 0))

    in_specs = [pl.BlockSpec((tile_b, D), lambda i: (i, 0))]
    in_specs += [resident(a) for a in layer_inputs]
    out_spec = pl.BlockSpec((tile_b, n_pad), lambda i: (i, 0))

    out = pl.pallas_call(
        _make_mlp_kernel(num_hidden, ALPHA, compute_dtype),
        out_shape=jax.ShapeDtypeStruct((b_pad, n_pad), jnp.float32),
        grid=grid,
        in_specs=in_specs,
        out_specs=out_spec,
        compiler_params=pltpu.CompilerParams(
            dimension_semantics=("parallel",),
            vmem_limit_bytes=vmem_limit_bytes),
    )(x, *layer_inputs)

    return out[:B, :dfo]


def init_params(key, input_dim, hidden_units):
    """PyTorch-like init: Linear U(-1/sqrt(fan_in), 1/sqrt(fan_in));
    BatchNorm1d: gamma=1, beta=0, running_mean=0, running_var=1."""
    dims = [input_dim] + list(hidden_units)
    hidden_params = []
    for i in range(len(dims) - 1):
        d_in, d_out = dims[i], dims[i + 1]
        key, kw, kb = jax.random.split(key, 3)
        bound = 1.0 / jnp.sqrt(d_in)
        w_t = jax.random.uniform(kw, (d_in, d_out), jnp.float32, -bound, bound)
        b = jax.random.uniform(kb, (1, d_out), jnp.float32, -bound, bound)
        gamma = jnp.ones((1, d_out), jnp.float32)
        beta = jnp.zeros((1, d_out), jnp.float32)
        rmean = jnp.zeros((1, d_out), jnp.float32)
        rvar = jnp.ones((1, d_out), jnp.float32)
        hidden_params.append((w_t, b, gamma, beta, rmean, rvar))

    d_in = dims[-1]
    key, kw, kb = jax.random.split(key, 3)
    bound = 1.0 / jnp.sqrt(d_in)
    wf_t = jax.random.uniform(kw, (d_in, 1), jnp.float32, -bound, bound)
    bf = jax.random.uniform(kb, (1, 1), jnp.float32, -bound, bound)
    return hidden_params, (wf_t, bf)


def reference_forward(x, hidden_params, final_params):
    """Pure-JAX reference (unfolded BN, unpadded), eval-mode semantics."""
    h = x
    for (w_t, b, g, be, rm, rv) in hidden_params:
        h = h @ w_t + b
        z = (h - rm) / jnp.sqrt(rv + BN_EPS) * g + be
        p = jax.nn.sigmoid(z)
        h = p * h + (1.0 - p) * ALPHA * h
    wf_t, bf = final_params
    return h @ wf_t + bf


if __name__ == "__main__":
    batch = 32
    input_dim = 16
    hidden_units = [32, 32]

    key = jax.random.PRNGKey(0)
    key, kx = jax.random.split(key)
    x = jax.random.normal(kx, (batch, input_dim), jnp.float32)

    hidden_params, final_params = init_params(key, input_dim, hidden_units)

    # Small tile_b so the demo actually exercises the batch grid / pipelining path.
    out = mlp_layer_forward(x, hidden_params, final_params, tile_b=8)
    out = jax.block_until_ready(out)

    ref = reference_forward(x, hidden_params, final_params)
    assert out.shape == (batch, 1), out.shape
    assert jnp.allclose(out, ref, atol=1e-5, rtol=1e-5), "mismatch vs. reference"

    print("KERNEL_OK")
</pallas_src>

<mosaic_0001>
module attributes {stable_mosaic.version = 11 : i64} {
  func.func @kernel(%arg0: i32, %arg1: memref<8x16xf32, #tpu.memory_space<vmem>>, %arg2: memref<16x128xf32, #tpu.memory_space<vmem>>, %arg3: memref<3x128xf32, #tpu.memory_space<vmem>>, %arg4: memref<128x128xf32, #tpu.memory_space<vmem>>, %arg5: memref<3x128xf32, #tpu.memory_space<vmem>>, %arg6: memref<128x128xf32, #tpu.memory_space<vmem>>, %arg7: memref<1x128xf32, #tpu.memory_space<vmem>>, %arg8: memref<8x128xf32, #tpu.memory_space<vmem>>) attributes {dimension_semantics = [#tpu.dimension_semantics<parallel>], iteration_bounds = array<i64: 4>, scalar_prefetch = 0 : i64, scratch_operands = 0 : i64, tpu.core_type = #tpu.core_type<tc>, window_params = [{transform_indices = @transform_0, window_bounds = array<i64: 8, 16>}, {pipeline_mode = #tpu.pipeline_mode<synchronous>, transform_indices = @transform_1, window_bounds = array<i64: 16, 128>}, {pipeline_mode = #tpu.pipeline_mode<synchronous>, transform_indices = @transform_2, window_bounds = array<i64: 3, 128>}, {pipeline_mode = #tpu.pipeline_mode<synchronous>, transform_indices = @transform_3, window_bounds = array<i64: 128, 128>}, {pipeline_mode = #tpu.pipeline_mode<synchronous>, transform_indices = @transform_4, window_bounds = array<i64: 3, 128>}, {pipeline_mode = #tpu.pipeline_mode<synchronous>, transform_indices = @transform_5, window_bounds = array<i64: 128, 128>}, {pipeline_mode = #tpu.pipeline_mode<synchronous>, transform_indices = @transform_6, window_bounds = array<i64: 1, 128>}, {transform_indices = @transform_7, window_bounds = array<i64: 8, 128>}]} {
    %c0 = arith.constant 0 : index
    %c0_0 = arith.constant 0 : index
    %0 = vector.load %arg1[%c0, %c0_0] : memref<8x16xf32, #tpu.memory_space<vmem>>, vector<8x16xf32>
    %c0_1 = arith.constant 0 : index
    %c0_2 = arith.constant 0 : index
    %1 = vector.load %arg2[%c0_1, %c0_2] : memref<16x128xf32, #tpu.memory_space<vmem>>, vector<16x128xf32>
    %cst = arith.constant dense<0.000000e+00> : vector<8x128xf32>
    %2 = tpu.matmul %0, %1, %cst {dimension_numbers = #tpu.dot_dimension_numbers<[1], [0], [0], [1], [0, 0, 1, 1], [], []>} : vector<8x16xf32>, vector<16x128xf32>, vector<8x128xf32> -> vector<8x128xf32>
    %c0_3 = arith.constant 0 : index
    %c0_4 = arith.constant 0 : index
    %3 = vector.load %arg3[%c0_3, %c0_4] : memref<3x128xf32, #tpu.memory_space<vmem>>, vector<1x128xf32>
    %4 = vector.broadcast %3 : vector<1x128xf32> to vector<8x128xf32>
    %5 = arith.addf %2, %4 : vector<8x128xf32>
    %c1 = arith.constant 1 : index
    %c0_5 = arith.constant 0 : index
    %6 = vector.load %arg3[%c1, %c0_5] : memref<3x128xf32, #tpu.memory_space<vmem>>, vector<1x128xf32>
    %7 = vector.broadcast %6 : vector<1x128xf32> to vector<8x128xf32>
    %8 = arith.mulf %5, %7 : vector<8x128xf32>
    %c2 = arith.constant 2 : index
    %c0_6 = arith.constant 0 : index
    %9 = vector.load %arg3[%c2, %c0_6] : memref<3x128xf32, #tpu.memory_space<vmem>>, vector<1x128xf32>
    %10 = vector.broadcast %9 : vector<1x128xf32> to vector<8x128xf32>
    %11 = arith.addf %8, %10 : vector<8x128xf32>
    %12 = arith.negf %11 : vector<8x128xf32>
    %13 = math.exp %12 : vector<8x128xf32>
    %cst_7 = arith.constant 1.000000e+00 : f32
    %14 = vector.broadcast %cst_7 : f32 to vector<8x128xf32>
    %15 = arith.addf %14, %13 : vector<8x128xf32>
    %16 = arith.divf %14, %15 : vector<8x128xf32>
    %17 = arith.mulf %16, %5 : vector<8x128xf32>
    %c0_8 = arith.constant 0 : index
    %c0_9 = arith.constant 0 : index
    %18 = vector.load %arg4[%c0_8, %c0_9] : memref<128x128xf32, #tpu.memory_space<vmem>>, vector<128x128xf32>
    %cst_10 = arith.constant dense<0.000000e+00> : vector<8x128xf32>
    %19 = tpu.matmul %17, %18, %cst_10 {dimension_numbers = #tpu.dot_dimension_numbers<[1], [0], [0], [1], [0, 0, 1, 1], [], []>} : vector<8x128xf32>, vector<128x128xf32>, vector<8x128xf32> -> vector<8x128xf32>
    %c0_11 = arith.constant 0 : index
    %c0_12 = arith.constant 0 : index
    %20 = vector.load %arg5[%c0_11, %c0_12] : memref<3x128xf32, #tpu.memory_space<vmem>>, vector<1x128xf32>
    %21 = vector.broadcast %20 : vector<1x128xf32> to vector<8x128xf32>
    %22 = arith.addf %19, %21 : vector<8x128xf32>
    %c1_13 = arith.constant 1 : index
    %c0_14 = arith.constant 0 : index
    %23 = vector.load %arg5[%c1_13, %c0_14] : memref<3x128xf32, #tpu.memory_space<vmem>>, vector<1x128xf32>
    %24 = vector.broadcast %23 : vector<1x128xf32> to vector<8x128xf32>
    %25 = arith.mulf %22, %24 : vector<8x128xf32>
    %c2_15 = arith.constant 2 : index
    %c0_16 = arith.constant 0 : index
    %26 = vector.load %arg5[%c2_15, %c0_16] : memref<3x128xf32, #tpu.memory_space<vmem>>, vector<1x128xf32>
    %27 = vector.broadcast %26 : vector<1x128xf32> to vector<8x128xf32>
    %28 = arith.addf %25, %27 : vector<8x128xf32>
    %29 = arith.negf %28 : vector<8x128xf32>
    %30 = math.exp %29 : vector<8x128xf32>
    %cst_17 = arith.constant 1.000000e+00 : f32
    %31 = vector.broadcast %cst_17 : f32 to vector<8x128xf32>
    %32 = arith.addf %31, %30 : vector<8x128xf32>
    %33 = arith.divf %31, %32 : vector<8x128xf32>
    %34 = arith.mulf %33, %22 : vector<8x128xf32>
    %c0_18 = arith.constant 0 : index
    %c0_19 = arith.constant 0 : index
    %35 = vector.load %arg6[%c0_18, %c0_19] : memref<128x128xf32, #tpu.memory_space<vmem>>, vector<128x128xf32>
    %cst_20 = arith.constant dense<0.000000e+00> : vector<8x128xf32>
    %36 = tpu.matmul %34, %35, %cst_20 {dimension_numbers = #tpu.dot_dimension_numbers<[1], [0], [0], [1], [0, 0, 1, 1], [], []>} : vector<8x128xf32>, vector<128x128xf32>, vector<8x128xf32> -> vector<8x128xf32>
    %c0_21 = arith.constant 0 : index
    %c0_22 = arith.constant 0 : index
    %37 = vector.load %arg7[%c0_21, %c0_22] : memref<1x128xf32, #tpu.memory_space<vmem>>, vector<1x128xf32>
    %38 = vector.broadcast %37 : vector<1x128xf32> to vector<8x128xf32>
    %39 = arith.addf %36, %38 : vector<8x128xf32>
    %c0_23 = arith.constant 0 : index
    %c0_24 = arith.constant 0 : index
    %40 = vector.load %arg8[%c0_23, %c0_24] : memref<8x128xf32, #tpu.memory_space<vmem>>, vector<8x128xf32>
    tpu.vector_store %arg8[%c0_23, %c0_24], %39 {strides = array<i32>} : memref<8x128xf32, #tpu.memory_space<vmem>>, vector<8x128xf32>,
    return
  }
  func.func @transform_0(%arg0: i32) -> (i32, i32) {
    %c0_i32 = arith.constant 0 : i32
    %c0_i32_0 = arith.constant 0 : i32
    return %arg0, %c0_i32 : i32, i32
  }
  func.func @transform_1(%arg0: i32) -> (i32, i32) {
    %c0_i32 = arith.constant 0 : i32
    %c0_i32_0 = arith.constant 0 : i32
    %c0_i32_1 = arith.constant 0 : i32
    return %c0_i32, %c0_i32_0 : i32, i32
  }
  func.func @transform_2(%arg0: i32) -> (i32, i32) {
    %c0_i32 = arith.constant 0 : i32
    %c0_i32_0 = arith.constant 0 : i32
    %c0_i32_1 = arith.constant 0 : i32
    return %c0_i32, %c0_i32_0 : i32, i32
  }
  func.func @transform_3(%arg0: i32) -> (i32, i32) {
    %c0_i32 = arith.constant 0 : i32
    %c0_i32_0 = arith.constant 0 : i32
    %c0_i32_1 = arith.constant 0 : i32
    return %c0_i32, %c0_i32_0 : i32, i32
  }
  func.func @transform_4(%arg0: i32) -> (i32, i32) {
    %c0_i32 = arith.constant 0 : i32
    %c0_i32_0 = arith.constant 0 : i32
    %c0_i32_1 = arith.constant 0 : i32
    return %c0_i32, %c0_i32_0 : i32, i32
  }
  func.func @transform_5(%arg0: i32) -> (i32, i32) {
    %c0_i32 = arith.constant 0 : i32
    %c0_i32_0 = arith.constant 0 : i32
    %c0_i32_1 = arith.constant 0 : i32
    return %c0_i32, %c0_i32_0 : i32, i32
  }
  func.func @transform_6(%arg0: i32) -> (i32, i32) {
    %c0_i32 = arith.constant 0 : i32
    %c0_i32_0 = arith.constant 0 : i32
    %c0_i32_1 = arith.constant 0 : i32
    return %c0_i32, %c0_i32_0 : i32, i32
  }
  func.func @transform_7(%arg0: i32) -> (i32, i32) {
    %c0_i32 = arith.constant 0 : i32
    %c0_i32_0 = arith.constant 0 : i32
    return %arg0, %c0_i32 : i32, i32
  }
}

</mosaic_0001>

<llo_original>
// kernel: tpu_custom_call.1
$region0: #{tpu_custom_call.1}
  #allocation0 [shape = 'u32[]', space=smem, size = 0x4, offset = 0x4, fixed_abs, tag = 'smem constant byte address 0x4 - core index']
  #allocation1 [shape = 'u32[144,128]{1,0:T(1,128)}', space=vmem, size = 0x12000, scoped, tag = 'internal scratch']
  %s0 = inlined_call_operand.vmem [shape: f32[32,16], index: 0, kind: input, shape index: {}]
  %s1 = inlined_call_operand.vmem [shape: f32[16,128], index: 1, kind: input, shape index: {}]
  %s2 = inlined_call_operand.vmem [shape: f32[3,128], index: 2, kind: input, shape index: {}]
  %s3 = inlined_call_operand.hbm [shape: f32[128,128], index: 3, kind: input, shape index: {}]
  %s4 = inlined_call_operand.vmem [shape: f32[3,128], index: 4, kind: input, shape index: {}]
  %s5 = inlined_call_operand.hbm [shape: f32[128,128], index: 5, kind: input, shape index: {}]
  %s6 = inlined_call_operand.vmem [shape: f32[1,128], index: 6, kind: input, shape index: {}]
  %s7 = inlined_call_operand.hbm [shape: f32[32,128], index: 7, kind: output, shape index: {}]
  %s8 = sld [smem:[#allocation0]]
  $region69: #{tpu_custom_call.1} parent=0
    _
  %s10 = ssub.s32 1, %s8
  %s11 = scalar_select 0, %s10, %s8
  $region1: #{tpu_custom_call.1} parent=0
    #allocation2 [shape = 'u8[65536]{0}', space=vmem, size = 0x10000, scoped, tag = 'input window, operand 3, single buffered']
    #allocation3 [shape = 's32[2]{0}', space=sflag, size = 0x8, scoped, tag = 'scoped memory for tpu_custom_call.1']
    #allocation4 [shape = 's32[2]{0}', space=sflag, size = 0x8, scoped, tag = 'scoped memory for tpu_custom_call.1']
    #allocation5 [shape = 'u8[65536]{0}', space=vmem, size = 0x10000, scoped, tag = 'input window, operand 5, single buffered']
    #allocation6 [shape = 's32[1]{0}', space=sflag, size = 0x4, scoped, tag = 'scoped memory for tpu_custom_call.1']
    #allocation7 [shape = 'u8[8192]{0}', space=vmem, size = 0x2000, scoped, tag = 'output window, operand 0']
    %12 = vsyncpa [#allocation3], 0
    %13 = vsyncpa [#allocation6], 0
    %14 = vsyncpa [#allocation4], 0
    %s15 = scalar_lea.sflag [#allocation4], 1
    %16 = vsyncpa %s15, 0
    loop: start=0, step=1, limit=6
    $region2: #{tpu_custom_call.1} parent=1 // loop_pre_header
      _
    $region3: #{tpu_custom_call.1} parent=1 // loop_header
      %s18 = sphi 0, %s22
      %p19 = scmp.ge.s32.totalorder %s18, 6
      %s28 = sphi 0, %s30
      %s31 = sphi 0, %s28
      %s32 = sphi 0, %s31
      %s48 = sphi 0, %s32
      %s52 = sphi 0, %s52
      %s54 = sphi 0, %s52
      %s55 = sphi 0, %s54
      %s69 = sphi 0, %s55
      %s73 = sphi 0, %s73
      %s75 = sphi 0, %s73
      %s76 = sphi 0, %s75
      %s90 = sphi 0, %s76
      %s94 = sphi 0, %s94
      %s96 = sphi 0, %s94
      %s97 = sphi 0, %s96
      %s111 = sphi 0, %s97
      %s115 = sphi 0, %s115
      %s117 = sphi 0, %s115
      %s118 = sphi 0, %s117
      %s132 = sphi 0, %s118
      %s136 = sphi 0, %s136
      %s138 = sphi 0, %s136
      %s139 = sphi 0, %s138
      %s153 = sphi 0, %s139
      %s157 = sphi 0, %s157
      %s159 = sphi 0, %s157
      %s160 = sphi 0, %s159
      %s174 = sphi 0, %s160
      %s180 = sphi 0, %s182
      %s183 = sphi 0, %s180
      %s184 = sphi 0, %s183
      %s200 = sphi 0, %s184
    $region4: #{tpu_custom_call.1} parent=1 // loop_header_branch
      %21 = sbr.rel (%p19) target = $region8
    $region5: #{tpu_custom_call.1} parent=1 // loop_body
      %s23 = ssub.s32 %s18, 1
      %s24 = ssub.s32 %s18, 2
      %s25 = sadd.s32 %s18, 1
      %s26 = ssub.s32 %s18, %s25
      %p27 = scmp.eq.s32.totalorder %s26, 0
      %s29 = sadd.s32 %s28, 1
      %s30 = scalar_select %p27, %s28, %s29
      %p33 = pneg %p27
      %p34 = scmp.eq.s32.totalorder %s18, 3
      %p35 = por %p33, %p34
      %p36 = scmp.ne.s32.totalorder %s28, %s31
      %p37 = scmp.eq.s32.totalorder %s18, 0
      %p38 = por %p36, %p37
      %p39 = scmp.ne.s32.totalorder %s28, %s31
      %p40 = scmp.eq.s32.totalorder %s23, 3
      %p41 = por %p39, %p40
      %p42 = scmp.ne.s32.totalorder %s31, %s32
      %p43 = scmp.eq.s32.totalorder %s23, 0
      %p44 = por %p42, %p43
      %p45 = scmp.ne.s32.totalorder %s31, %s32
      %p46 = scmp.eq.s32.totalorder %s24, 3
      %p47 = por %p45, %p46
      %p49 = scmp.ne.s32.totalorder %s32, %s48
      %p50 = scmp.eq.s32.totalorder %s24, 0
      %p51 = por %p49, %p50
      %s53 = sadd.s32 %s52, 1
      %p56 = scmp.eq.s32.totalorder %s18, 3
      %p57 = scmp.ne.s32.totalorder %s52, %s54
      %p58 = scmp.eq.s32.totalorder %s18, 0
      %p59 = por %p57, %p58
      %p60 = scmp.ne.s32.totalorder %s52, %s54
      %p61 = scmp.eq.s32.totalorder %s23, 3
      %p62 = por %p60, %p61
      %p63 = scmp.ne.s32.totalorder %s54, %s55
      %p64 = scmp.eq.s32.totalorder %s23, 0
      %p65 = por %p63, %p64
      %p66 = scmp.ne.s32.totalorder %s54, %s55
      %p67 = scmp.eq.s32.totalorder %s24, 3
      %p68 = por %p66, %p67
      %p70 = scmp.ne.s32.totalorder %s55, %s69
      %p71 = scmp.eq.s32.totalorder %s24, 0
      %p72 = por %p70, %p71
      %s74 = sadd.s32 %s73, 1
      %p77 = scmp.eq.s32.totalorder %s18, 3
      %p78 = scmp.ne.s32.totalorder %s73, %s75
      %p79 = scmp.eq.s32.totalorder %s18, 0
      %p80 = por %p78, %p79
      %p81 = scmp.ne.s32.totalorder %s73, %s75
      %p82 = scmp.eq.s32.totalorder %s23, 3
      %p83 = por %p81, %p82
      %p84 = scmp.ne.s32.totalorder %s75, %s76
      %p85 = scmp.eq.s32.totalorder %s23, 0
      %p86 = por %p84, %p85
      %p87 = scmp.ne.s32.totalorder %s75, %s76
      %p88 = scmp.eq.s32.totalorder %s24, 3
      %p89 = por %p87, %p88
      %p91 = scmp.ne.s32.totalorder %s76, %s90
      %p92 = scmp.eq.s32.totalorder %s24, 0
      %p93 = por %p91, %p92
      %s95 = sadd.s32 %s94, 1
      %p98 = scmp.eq.s32.totalorder %s18, 3
      %p99 = scmp.ne.s32.totalorder %s94, %s96
      %p100 = scmp.eq.s32.totalorder %s18, 0
      %p101 = por %p99, %p100
      %p102 = scmp.ne.s32.totalorder %s94, %s96
      %p103 = scmp.eq.s32.totalorder %s23, 3
      %p104 = por %p102, %p103
      %p105 = scmp.ne.s32.totalorder %s96, %s97
      %p106 = scmp.eq.s32.totalorder %s23, 0
      %p107 = por %p105, %p106
      %p108 = scmp.ne.s32.totalorder %s96, %s97
      %p109 = scmp.eq.s32.totalorder %s24, 3
      %p110 = por %p108, %p109
      %p112 = scmp.ne.s32.totalorder %s97, %s111
      %p113 = scmp.eq.s32.totalorder %s24, 0
      %p114 = por %p112, %p113
      %s116 = sadd.s32 %s115, 1
      %p119 = scmp.eq.s32.totalorder %s18, 3
      %p120 = scmp.ne.s32.totalorder %s115, %s117
      %p121 = scmp.eq.s32.totalorder %s18, 0
      %p122 = por %p120, %p121
      %p123 = scmp.ne.s32.totalorder %s115, %s117
      %p124 = scmp.eq.s32.totalorder %s23, 3
      %p125 = por %p123, %p124
      %p126 = scmp.ne.s32.totalorder %s117, %s118
      %p127 = scmp.eq.s32.totalorder %s23, 0
      %p128 = por %p126, %p127
      %p129 = scmp.ne.s32.totalorder %s117, %s118
      %p130 = scmp.eq.s32.totalorder %s24, 3
      %p131 = por %p129, %p130
      %p133 = scmp.ne.s32.totalorder %s118, %s132
      %p134 = scmp.eq.s32.totalorder %s24, 0
      %p135 = por %p133, %p134
      %s137 = sadd.s32 %s136, 1
      %p140 = scmp.eq.s32.totalorder %s18, 3
      %p141 = scmp.ne.s32.totalorder %s136, %s138
      %p142 = scmp.eq.s32.totalorder %s18, 0
      %p143 = por %p141, %p142
      %p144 = scmp.ne.s32.totalorder %s136, %s138
      %p145 = scmp.eq.s32.totalorder %s23, 3
      %p146 = por %p144, %p145
      %p147 = scmp.ne.s32.totalorder %s138, %s139
      %p148 = scmp.eq.s32.totalorder %s23, 0
      %p149 = por %p147, %p148
      %p150 = scmp.ne.s32.totalorder %s138, %s139
      %p151 = scmp.eq.s32.totalorder %s24, 3
      %p152 = por %p150, %p151
      %p154 = scmp.ne.s32.totalorder %s139, %s153
      %p155 = scmp.eq.s32.totalorder %s24, 0
      %p156 = por %p154, %p155
      %s158 = sadd.s32 %s157, 1
      %p161 = scmp.eq.s32.totalorder %s18, 3
      %p162 = scmp.ne.s32.totalorder %s157, %s159
      %p163 = scmp.eq.s32.totalorder %s18, 0
      %p164 = por %p162, %p163
      %p165 = scmp.ne.s32.totalorder %s157, %s159
      %p166 = scmp.eq.s32.totalorder %s23, 3
      %p167 = por %p165, %p166
      %p168 = scmp.ne.s32.totalorder %s159, %s160
      %p169 = scmp.eq.s32.totalorder %s23, 0
      %p170 = por %p168, %p169
      %p171 = scmp.ne.s32.totalorder %s159, %s160
      %p172 = scmp.eq.s32.totalorder %s24, 3
      %p173 = por %p171, %p172
      %p175 = scmp.ne.s32.totalorder %s160, %s174
      %p176 = scmp.eq.s32.totalorder %s24, 0
      %p177 = por %p175, %p176
      %s178 = ssub.s32 %s18, %s25
      %p179 = scmp.eq.s32.totalorder %s178, 0
      %s181 = sadd.s32 %s180, 1
      %s182 = scalar_select %p179, %s180, %s181
      %p185 = pneg %p179
      %p186 = scmp.eq.s32.totalorder %s18, 3
      %p187 = por %p185, %p186
      %p188 = scmp.ne.s32.totalorder %s180, %s183
      %p189 = scmp.eq.s32.totalorder %s18, 0
      %p190 = por %p188, %p189
      %p191 = scmp.ne.s32.totalorder %s180, %s183
      %p192 = scmp.eq.s32.totalorder %s23, 3
      %p193 = por %p191, %p192
      %p194 = scmp.ne.s32.totalorder %s183, %s184
      %p195 = scmp.eq.s32.totalorder %s23, 0
      %p196 = por %p194, %p195
      %p197 = scmp.ne.s32.totalorder %s183, %s184
      %p198 = scmp.eq.s32.totalorder %s24, 3
      %p199 = por %p197, %p198
      %p201 = scmp.ne.s32.totalorder %s184, %s200
      %p202 = scmp.eq.s32.totalorder %s24, 0
      %p203 = por %p201, %p202
      %p204 = scmp.le.s32.totalorder 1, %s18
      %p205 = scmp.lt.s32.totalorder %s18, 5
      %p206 = pnand %p204, %p205
      %p207 = pneg %p206
      // Predicated region
      $region9: #{tpu_custom_call.1} parent=5 // pred_check
        _
      $region10: #{tpu_custom_call.1} parent=5 // pred_check_branch
        %209 = sbr.rel (%p206) target = $region12
      $region11: #{tpu_custom_call.1} parent=5 // pred_region
        %s210 = ssub.s32 %s18, 1
        // Predicated region
        $region13: #{tpu_custom_call.1} parent=11 // pred_check
          %p211 = pneg %p65
        $region14: #{tpu_custom_call.1} parent=11 // pred_check_branch
          %213 = sbr.rel (%p211) target = $region16
        $region15: #{tpu_custom_call.1} parent=11 // pred_region
          _
        $region16: #{tpu_custom_call.1} parent=11 // pred_fallthru
          _
        // Predicated region
        $region17: #{tpu_custom_call.1} parent=11 // pred_check
          %p214 = pneg %p86
        $region18: #{tpu_custom_call.1} parent=11 // pred_check_branch
          %216 = sbr.rel (%p214) target = $region20
        $region19: #{tpu_custom_call.1} parent=11 // pred_region
          _
        $region20: #{tpu_custom_call.1} parent=11 // pred_fallthru
          _
        // Predicated region
        $region21: #{tpu_custom_call.1} parent=11 // pred_check
          %p217 = pneg %p107
        $region22: #{tpu_custom_call.1} parent=11 // pred_check_branch
          %219 = sbr.rel (%p217) target = $region24
        $region23: #{tpu_custom_call.1} parent=11 // pred_region
          %s221 = ssub.s32 2048, 2048
          %222 = vsyncadd [#allocation3], %s221
          %s223 = sshll.u32 [#allocation2], 4
          %s224 = int_to_ptr.vmem [resolvable:$true] %s223
          %229 = dma.hbm_to_vmem [thread:$0]  %s3, 2048, %s224, [#allocation3], 128, 128, 8
        $region24: #{tpu_custom_call.1} parent=11 // pred_fallthru
          _
        // Predicated region
        $region25: #{tpu_custom_call.1} parent=11 // pred_check
          %p230 = pneg %p128
        $region26: #{tpu_custom_call.1} parent=11 // pred_check_branch
          %232 = sbr.rel (%p230) target = $region28
        $region27: #{tpu_custom_call.1} parent=11 // pred_region
          _
        $region28: #{tpu_custom_call.1} parent=11 // pred_fallthru
          _
        // Predicated region
        $region29: #{tpu_custom_call.1} parent=11 // pred_check
          %p233 = pneg %p149
        $region30: #{tpu_custom_call.1} parent=11 // pred_check_branch
          %235 = sbr.rel (%p233) target = $region32
        $region31: #{tpu_custom_call.1} parent=11 // pred_region
          %s237 = ssub.s32 2048, 2048
          %238 = vsyncadd [#allocation6], %s237
          %s239 = sshll.u32 [#allocation5], 4
          %s240 = int_to_ptr.vmem [resolvable:$true] %s239
          %245 = dma.hbm_to_vmem [thread:$0]  %s5, 2048, %s240, [#allocation6], 128, 128, 8
        $region32: #{tpu_custom_call.1} parent=11 // pred_fallthru
          _
        // Predicated region
        $region33: #{tpu_custom_call.1} parent=11 // pred_check
          %p246 = pneg %p170
        $region34: #{tpu_custom_call.1} parent=11 // pred_check_branch
          %248 = sbr.rel (%p246) target = $region36
        $region35: #{tpu_custom_call.1} parent=11 // pred_region
          _
        $region36: #{tpu_custom_call.1} parent=11 // pred_fallthru
          _
      $region12: #{tpu_custom_call.1} parent=5 // pred_fallthru
        _
      %p249 = scmp.lt.s32.totalorder %s18, 4
      // Predicated region
      $region37: #{tpu_custom_call.1} parent=5 // pred_check
        %p250 = pneg %p249
      $region38: #{tpu_custom_call.1} parent=5 // pred_check_branch
        %252 = sbr.rel (%p250) target = $region40
      $region39: #{tpu_custom_call.1} parent=5 // pred_region
        // Predicated region
        $region41: #{tpu_custom_call.1} parent=39 // pred_check
          %p253 = pneg %p38
        $region42: #{tpu_custom_call.1} parent=39 // pred_check_branch
          %255 = sbr.rel (%p253) target = $region44
        $region43: #{tpu_custom_call.1} parent=39 // pred_region
          %p256 = scmp.lt.s32.totalorder %s18, 3
          %s257 = scalar_select %p256, %s18, 3
          %s258 = smul.addr %s257, 8
          %s259 = scalar_lea.vmem %s0, %s258
        $region44: #{tpu_custom_call.1} parent=39 // pred_fallthru
          _
      $region40: #{tpu_custom_call.1} parent=5 // pred_fallthru
        _
      %p260 = scmp.le.s32.totalorder 1, %s18
      %p261 = scmp.lt.s32.totalorder %s18, 5
      %p262 = pnand %p260, %p261
      %p263 = pneg %p262
      // Predicated region
      $region45: #{tpu_custom_call.1} parent=5 // pred_check
        _
      $region46: #{tpu_custom_call.1} parent=5 // pred_check_branch
        %265 = sbr.rel (%p262) target = $region48
      $region47: #{tpu_custom_call.1} parent=5 // pred_region
        %s266 = ssub.s32 %s18, 1
        // Predicated region
        $region49: #{tpu_custom_call.1} parent=47 // pred_check
          %p267 = pneg %p107
        $region50: #{tpu_custom_call.1} parent=47 // pred_check_branch
          %269 = sbr.rel (%p267) target = $region52
        $region51: #{tpu_custom_call.1} parent=47 // pred_region
          %270 = dma.done [#allocation3], 2048
        $region52: #{tpu_custom_call.1} parent=47 // pred_fallthru
          _
        // Predicated region
        $region53: #{tpu_custom_call.1} parent=47 // pred_check
          %p271 = pneg %p149
        $region54: #{tpu_custom_call.1} parent=47 // pred_check_branch
          %273 = sbr.rel (%p271) target = $region56
        $region55: #{tpu_custom_call.1} parent=47 // pred_region
          %274 = dma.done [#allocation6], 2048
        $region56: #{tpu_custom_call.1} parent=47 // pred_fallthru
          _
        %p275 = scmp.lt.s32.totalorder %s23, 3
        %s276 = scalar_select %p275, %s23, 3
        %s277 = smul.addr %s276, 8
        %s278 = scalar_lea.vmem %s0, %s277
        %p279 = pneg %p44
        %p280 = pneg %p41
        %p281 = pneg %p65
        %p282 = pneg %p62
        %p283 = pneg %p86
        %p284 = pneg %p83
        %p285 = pneg %p107
        %p286 = pneg %p104
        %p287 = pneg %p128
        %p288 = pneg %p125
        %p289 = pneg %p149
        %p290 = pneg %p146
        %p291 = pneg %p170
        %p292 = pneg %p167
        %p293 = pneg %p196
        %p294 = pneg %p193
        %s295 = sand.u32 %s183, 1
        %s296 = scalar_lea.sflag [#allocation4], %s295
        %s297 = sand.u32 %s183, 1
        %s298 = smul.addr %s297, 8
        %s299 = scalar_lea.vmem [#allocation7], %s298
        %p300 = scmp.lt.s32.totalorder %s23, 3
        %s301 = scalar_select %p300, %s23, 3
        %s302 = smul.addr %s301, 8
        %s303 = scalar_lea.vmem %s0, %s302
        %v304 = vld [vmem:[%s303] sm:$0xff]
        %v305 = vld [vmem:[%s1] sm:$0xff]
        %v306 = vld [vmem:[%s1 + $0x8] sm:$0xff]
        %v307 = vld [vmem:[%s2] sm:$0x1]
        %v308 = vlaneseq
        %v309 = vshrl.u32 %v308, 7
        %v310 = vsub.s32 0, %v309
        %v311 = vrot.slane %v307, %v310
        %vm312 = vcmask 130048
        %v314 = vsel %vm312, %v304, 0
        %316 = vmatprep.subr.mxu0 0.0
        %317 = vmatpush1.msra.mxu0 %v305
        %318 = vmatprep.subr.mxu0 0.0
        %319 = vmatpush1.msra.mxu0 %v306
        %320 = vmatprep.subr.mxu0 0.0
        %321 = vmatpush1.msra.mxu0 0.0
        %322 = vmatprep.subr.mxu0 0.0
        %323 = vmatpush1.msra.mxu0 0.0
        %324 = vmatprep.subr.mxu0 0.0
        %325 = vmatpush1.msra.mxu0 0.0
        %326 = vmatprep.subr.mxu0 0.0
        %327 = vmatpush1.msra.mxu0 0.0
        %328 = vmatprep.subr.mxu0 0.0
        %329 = vmatpush1.msra.mxu0 0.0
        %330 = vmatprep.subr.mxu0 0.0
        %331 = vmatpush1.msra.mxu0 0.0
        %332 = vmatprep.subr.mxu0 0.0
        %333 = vmatpush1.msra.mxu0 0.0
        %334 = vmatprep.subr.mxu0 0.0
        %335 = vmatpush1.msra.mxu0 0.0
        %336 = vmatprep.subr.mxu0 0.0
        %337 = vmatpush1.msra.mxu0 0.0
        %338 = vmatprep.subr.mxu0 0.0
        %339 = vmatpush1.msra.mxu0 0.0
        %340 = vmatprep.subr.mxu0 0.0
        %341 = vmatpush1.msra.mxu0 0.0
        %342 = vmatprep.subr.mxu0 0.0
        %343 = vmatpush1.msra.mxu0 0.0
        %344 = vmatprep.subr.mxu0 0.0
        %345 = vmatpush1.msra.mxu0 0.0
        %346 = vmatprep.subr.mxu0 0.0
        %347 = vmatpush1.msra.mxu0 0.0
        %348 = vmatprep.subr.mxu0 0.0
        %349 = vmatpush1.msra.mxu0 0.0
        %350 = vmatprep.subr.mxu0 0.0
        %351 = vmatpush1.msra.mxu0 0.0
        %352 = vmatprep.subr.mxu0 0.0
        %353 = vmatpush1.msra.mxu0 0.0
        %354 = vmatprep.subr.mxu0 0.0
        %355 = vmatpush1.msra.mxu0 0.0
        %356 = vmatprep.subr.mxu0 0.0
        %357 = vmatpush1.msra.mxu0 0.0
        %358 = vmatprep.subr.mxu0 0.0
        %359 = vmatpush1.msra.mxu0 0.0
        %360 = vmatprep.subr.mxu0 0.0
        %361 = vmatpush1.msra.mxu0 0.0
        %362 = vmatprep.subr.mxu0 0.0
        %363 = vmatpush1.msra.mxu0 0.0
        %364 = vmatprep.subr.mxu0 0.0
        %365 = vmatpush1.msra.mxu0 0.0
        %366 = vmatprep.subr.mxu0 0.0
        %367 = vmatpush1.msra.mxu0 0.0
        %368 = vmatprep.subr.mxu0 0.0
        %369 = vmatpush1.msra.mxu0 0.0
        %370 = vmatprep.subr.mxu0 0.0
        %371 = vmatpush1.msra.mxu0 0.0
        %372 = vmatprep.subr.mxu0 0.0
        %373 = vmatpush1.msra.mxu0 0.0
        %374 = vmatprep.subr.mxu0 0.0
        %375 = vmatpush1.msra.mxu0 0.0
        %376 = vmatprep.subr.mxu0 0.0
        %377 = vmatpush1.msra.mxu0 0.0
        %378 = vmatprep.subr.mxu0 0.0
        %379 = vmatpush1.msra.mxu0 0.0
        %380 = vmatprep.mubr.f32.mxu0 0.0
        %381 = vmatmul.mubr.f32.gmra.mrb[0].mxu0 %v314
        %v382 = vpop.f32.mrb[0].mxu0
        %v383 = vadd.f32 %v311, %v382
        %v384 = vpop.f32.mrb[0].mxu0
        %385 = vdwg.mxu0
        %v386 = vld [vmem:[%s2 + $0x1] sm:$0x1]
        %v387 = vlaneseq
        %v388 = vshrl.u32 %v387, 7
        %v389 = vsub.s32 0, %v388
        %v390 = vrot.slane %v386, %v389
        %v391 = vmul.f32 %v383, %v390
        %v392 = vld [vmem:[%s2 + $0x2] sm:$0x1]
        %v393 = vlaneseq
        %v394 = vshrl.u32 %v393, 7
        %v395 = vsub.s32 0, %v394
        %v396 = vrot.slane %v392, %v395
        %v397 = vadd.f32 %v391, %v396
        %v398 = vxor.u32 %v397, 2147483648
        %v399 = vmul.f32 %v398, 1.442695
        %v400 = vpow.pop %v399
        %v401 = vadd.f32 %v400, 1.0
        %v402 = vrcp.pop %v401
        %v403 = vmul.f32 1.0, %v402
        %v404 = vmul.f32 %v403, %v383
        %v405 = vld [vmem:[#allocation2] sm:$0xff]
        %v406 = vld [vmem:[#allocation2 + $0x8] sm:$0xff]
        %v407 = vld [vmem:[#allocation2 + $0x10] sm:$0xff]
        %v408 = vld [vmem:[#allocation2 + $0x18] sm:$0xff]
        %v409 = vld [vmem:[#allocation2 + $0x20] sm:$0xff]
        %v410 = vld [vmem:[#allocation2 + $0x28] sm:$0xff]
        %v411 = vld [vmem:[#allocation2 + $0x30] sm:$0xff]
        %v412 = vld [vmem:[#allocation2 + $0x38] sm:$0xff]
        %v413 = vld [vmem:[#allocation2 + $0x40] sm:$0xff]
        %v414 = vld [vmem:[#allocation2 + $0x48] sm:$0xff]
        %v415 = vld [vmem:[#allocation2 + $0x50] sm:$0xff]
        %v416 = vld [vmem:[#allocation2 + $0x58] sm:$0xff]
        %v417 = vld [vmem:[#allocation2 + $0x60] sm:$0xff]
        %v418 = vld [vmem:[#allocation2 + $0x68] sm:$0xff]
        %v419 = vld [vmem:[#allocation2 + $0x70] sm:$0xff]
        %v420 = vld [vmem:[#allocation2 + $0x78] sm:$0xff]
        %v421 = vld [vmem:[%s4] sm:$0x1]
        %v422 = vlaneseq
        %v423 = vshrl.u32 %v422, 7
        %v424 = vsub.s32 0, %v423
        %v425 = vrot.slane %v421, %v424
        %426 = vmatprep.subr.mxu0 0.0
        %427 = vmatpush1.msra.mxu0 %v405
        %428 = vmatprep.subr.mxu0 0.0
        %429 = vmatpush1.msra.mxu0 %v406
        %430 = vmatprep.subr.mxu0 0.0
        %431 = vmatpush1.msra.mxu0 %v407
        %432 = vmatprep.subr.mxu0 0.0
        %433 = vmatpush1.msra.mxu0 %v408
        %434 = vmatprep.subr.mxu0 0.0
        %435 = vmatpush1.msra.mxu0 %v409
        %436 = vmatprep.subr.mxu0 0.0
        %437 = vmatpush1.msra.mxu0 %v410
        %438 = vmatprep.subr.mxu0 0.0
        %439 = vmatpush1.msra.mxu0 %v411
        %440 = vmatprep.subr.mxu0 0.0
        %441 = vmatpush1.msra.mxu0 %v412
        %442 = vmatprep.subr.mxu0 0.0
        %443 = vmatpush1.msra.mxu0 %v413
        %444 = vmatprep.subr.mxu0 0.0
        %445 = vmatpush1.msra.mxu0 %v414
        %446 = vmatprep.subr.mxu0 0.0
        %447 = vmatpush1.msra.mxu0 %v415
        %448 = vmatprep.subr.mxu0 0.0
        %449 = vmatpush1.msra.mxu0 %v416
        %450 = vmatprep.subr.mxu0 0.0
        %451 = vmatpush1.msra.mxu0 %v417
        %452 = vmatprep.subr.mxu0 0.0
        %453 = vmatpush1.msra.mxu0 %v418
        %454 = vmatprep.subr.mxu0 0.0
        %455 = vmatpush1.msra.mxu0 %v419
        %456 = vmatprep.subr.mxu0 0.0
        %457 = vmatpush1.msra.mxu0 %v420
        %458 = vmatprep.subr.mxu0 0.0
        %459 = vmatpush1.msra.mxu0 0.0
        %460 = vmatprep.subr.mxu0 0.0
        %461 = vmatpush1.msra.mxu0 0.0
        %462 = vmatprep.subr.mxu0 0.0
        %463 = vmatpush1.msra.mxu0 0.0
        %464 = vmatprep.subr.mxu0 0.0
        %465 = vmatpush1.msra.mxu0 0.0
        %466 = vmatprep.subr.mxu0 0.0
        %467 = vmatpush1.msra.mxu0 0.0
        %468 = vmatprep.subr.mxu0 0.0
        %469 = vmatpush1.msra.mxu0 0.0
        %470 = vmatprep.subr.mxu0 0.0
        %471 = vmatpush1.msra.mxu0 0.0
        %472 = vmatprep.subr.mxu0 0.0
        %473 = vmatpush1.msra.mxu0 0.0
        %474 = vmatprep.subr.mxu0 0.0
        %475 = vmatpush1.msra.mxu0 0.0
        %476 = vmatprep.subr.mxu0 0.0
        %477 = vmatpush1.msra.mxu0 0.0
        %478 = vmatprep.subr.mxu0 0.0
        %479 = vmatpush1.msra.mxu0 0.0
        %480 = vmatprep.subr.mxu0 0.0
        %481 = vmatpush1.msra.mxu0 0.0
        %482 = vmatprep.subr.mxu0 0.0
        %483 = vmatpush1.msra.mxu0 0.0
        %484 = vmatprep.subr.mxu0 0.0
        %485 = vmatpush1.msra.mxu0 0.0
        %486 = vmatprep.subr.mxu0 0.0
        %487 = vmatpush1.msra.mxu0 0.0
        %488 = vmatprep.subr.mxu0 0.0
        %489 = vmatpush1.msra.mxu0 0.0
        %490 = vmatprep.mubr.f32.mxu0 0.0
        %491 = vmatmul.mubr.f32.gmra.mrb[0].mxu0 %v404
        %v492 = vpop.f32.mrb[0].mxu0
        %v493 = vadd.f32 %v425, %v492
        %v494 = vpop.f32.mrb[0].mxu0
        %495 = vdwg.mxu0
        %v496 = vld [vmem:[%s4 + $0x1] sm:$0x1]
        %v497 = vlaneseq
        %v498 = vshrl.u32 %v497, 7
        %v499 = vsub.s32 0, %v498
        %v500 = vrot.slane %v496, %v499
        %v501 = vmul.f32 %v493, %v500
        %v502 = vld [vmem:[%s4 + $0x2] sm:$0x1]
        %v503 = vlaneseq
        %v504 = vshrl.u32 %v503, 7
        %v505 = vsub.s32 0, %v504
        %v506 = vrot.slane %v502, %v505
        %v507 = vadd.f32 %v501, %v506
        %v508 = vxor.u32 %v507, 2147483648
        %v509 = vmul.f32 %v508, 1.442695
        %v510 = vpow.pop %v509
        %v511 = vadd.f32 %v510, 1.0
        %v512 = vrcp.pop %v511
        %v513 = vmul.f32 1.0, %v512
        %v514 = vmul.f32 %v513, %v493
        %v515 = vld [vmem:[#allocation5] sm:$0xff]
        %v516 = vld [vmem:[#allocation5 + $0x8] sm:$0xff]
        %v517 = vld [vmem:[#allocation5 + $0x10] sm:$0xff]
        %v518 = vld [vmem:[#allocation5 + $0x18] sm:$0xff]
        %v519 = vld [vmem:[#allocation5 + $0x20] sm:$0xff]
        %v520 = vld [vmem:[#allocation5 + $0x28] sm:$0xff]
        %v521 = vld [vmem:[#allocation5 + $0x30] sm:$0xff]
        %v522 = vld [vmem:[#allocation5 + $0x38] sm:$0xff]
        %v523 = vld [vmem:[#allocation5 + $0x40] sm:$0xff]
        %v524 = vld [vmem:[#allocation5 + $0x48] sm:$0xff]
        %v525 = vld [vmem:[#allocation5 + $0x50] sm:$0xff]
        %v526 = vld [vmem:[#allocation5 + $0x58] sm:$0xff]
        %v527 = vld [vmem:[#allocation5 + $0x60] sm:$0xff]
        %v528 = vld [vmem:[#allocation5 + $0x68] sm:$0xff]
        %v529 = vld [vmem:[#allocation5 + $0x70] sm:$0xff]
        %v530 = vld [vmem:[#allocation5 + $0x78] sm:$0xff]
        %v531 = vld [vmem:[%s6] sm:$0x1]
        %v533 = vlaneseq
        %v534 = vshrl.u32 %v533, 7
        %v535 = vsub.s32 0, %v534
        %v536 = vrot.slane %v531, %v535
        %538 = vmatprep.subr.mxu0 0.0
        %539 = vmatpush1.msra.mxu0 %v515
        %540 = vmatprep.subr.mxu0 0.0
        %541 = vmatpush1.msra.mxu0 %v516
        %542 = vmatprep.subr.mxu0 0.0
        %543 = vmatpush1.msra.mxu0 %v517
        %544 = vmatprep.subr.mxu0 0.0
        %545 = vmatpush1.msra.mxu0 %v518
        %546 = vmatprep.subr.mxu0 0.0
        %547 = vmatpush1.msra.mxu0 %v519
        %548 = vmatprep.subr.mxu0 0.0
        %549 = vmatpush1.msra.mxu0 %v520
        %550 = vmatprep.subr.mxu0 0.0
        %551 = vmatpush1.msra.mxu0 %v521
        %552 = vmatprep.subr.mxu0 0.0
        %553 = vmatpush1.msra.mxu0 %v522
        %554 = vmatprep.subr.mxu0 0.0
        %555 = vmatpush1.msra.mxu0 %v523
        %556 = vmatprep.subr.mxu0 0.0
        %557 = vmatpush1.msra.mxu0 %v524
        %558 = vmatprep.subr.mxu0 0.0
        %559 = vmatpush1.msra.mxu0 %v525
        %560 = vmatprep.subr.mxu0 0.0
        %561 = vmatpush1.msra.mxu0 %v526
        %562 = vmatprep.subr.mxu0 0.0
        %563 = vmatpush1.msra.mxu0 %v527
        %564 = vmatprep.subr.mxu0 0.0
        %565 = vmatpush1.msra.mxu0 %v528
        %566 = vmatprep.subr.mxu0 0.0
        %567 = vmatpush1.msra.mxu0 %v529
        %568 = vmatprep.subr.mxu0 0.0
        %569 = vmatpush1.msra.mxu0 %v530
        %570 = vmatprep.subr.mxu0 0.0
        %571 = vmatpush1.msra.mxu0 0.0
        %572 = vmatprep.subr.mxu0 0.0
        %573 = vmatpush1.msra.mxu0 0.0
        %574 = vmatprep.subr.mxu0 0.0
        %575 = vmatpush1.msra.mxu0 0.0
        %576 = vmatprep.subr.mxu0 0.0
        %577 = vmatpush1.msra.mxu0 0.0
        %578 = vmatprep.subr.mxu0 0.0
        %579 = vmatpush1.msra.mxu0 0.0
        %580 = vmatprep.subr.mxu0 0.0
        %581 = vmatpush1.msra.mxu0 0.0
        %582 = vmatprep.subr.mxu0 0.0
        %583 = vmatpush1.msra.mxu0 0.0
        %584 = vmatprep.subr.mxu0 0.0
        %585 = vmatpush1.msra.mxu0 0.0
        %586 = vmatprep.subr.mxu0 0.0
        %587 = vmatpush1.msra.mxu0 0.0
        %588 = vmatprep.subr.mxu0 0.0
        %589 = vmatpush1.msra.mxu0 0.0
        %590 = vmatprep.subr.mxu0 0.0
        %591 = vmatpush1.msra.mxu0 0.0
        %592 = vmatprep.subr.mxu0 0.0
        %593 = vmatpush1.msra.mxu0 0.0
        %594 = vmatprep.subr.mxu0 0.0
        %595 = vmatpush1.msra.mxu0 0.0
        %596 = vmatprep.subr.mxu0 0.0
        %597 = vmatpush1.msra.mxu0 0.0
        %598 = vmatprep.subr.mxu0 0.0
        %599 = vmatpush1.msra.mxu0 0.0
        %600 = vmatprep.subr.mxu0 0.0
        %601 = vmatpush1.msra.mxu0 0.0
        %602 = vmatprep.mubr.f32.mxu0 0.0
        %603 = vmatmul.mubr.f32.gmra.mrb[0].mxu0 %v514
        %v604 = vpop.f32.mrb[0].mxu0
        %v605 = vadd.f32 %v536, %v604
        %v606 = vpop.f32.mrb[0].mxu0
        %607 = vdwg.mxu0
        %608 = vst [vmem:[%s299] sm:$0xff] %v605
        %s609 = sand.u32 %s183, 1
        %s610 = scalar_lea.sflag [#allocation4], %s609
        %s611 = sand.u32 %s183, 1
        %s612 = smul.addr %s611, 8
        %s613 = scalar_lea.vmem [#allocation7], %s612
        // Predicated region
        $region57: #{tpu_custom_call.1} parent=47 // pred_check
          %p614 = pneg %p193
        $region58: #{tpu_custom_call.1} parent=47 // pred_check_branch
          %616 = sbr.rel (%p614) target = $region60
        $region59: #{tpu_custom_call.1} parent=47 // pred_region
          %s618 = ssub.s32 128, 128
          %619 = vsyncadd %s610, %s618
          %s620 = smul.addr %s23, 128
          %s621 = scalar_lea.hbm %s7, %s620
          %s623 = sshll.u32 %s613, 4
          %s624 = int_to_ptr.vmem [resolvable:$true] %s623
          %626 = dma.vmem_to_hbm [thread:$0]  %s624, 128, %s621, %s610
        $region60: #{tpu_custom_call.1} parent=47 // pred_fallthru
          _
      $region48: #{tpu_custom_call.1} parent=5 // pred_fallthru
        _
      %p627 = scmp.le.s32.totalorder 2, %s18
      // Predicated region
      $region61: #{tpu_custom_call.1} parent=5 // pred_check
        %p628 = pneg %p627
      $region62: #{tpu_custom_call.1} parent=5 // pred_check_branch
        %630 = sbr.rel (%p628) target = $region64
      $region63: #{tpu_custom_call.1} parent=5 // pred_region
        %s631 = ssub.s32 %s18, 2
        // Predicated region
        $region65: #{tpu_custom_call.1} parent=63 // pred_check
          %p632 = pneg %p199
        $region66: #{tpu_custom_call.1} parent=63 // pred_check_branch
          %634 = sbr.rel (%p632) target = $region68
        $region67: #{tpu_custom_call.1} parent=63 // pred_region
          %s635 = sand.u32 %s184, 1
          %s636 = scalar_lea.sflag [#allocation4], %s635
          %s637 = sand.u32 %s184, 1
          %s638 = smul.addr %s637, 8
          %s639 = scalar_lea.vmem [#allocation7], %s638
          %640 = dma.done %s636, 128
        $region68: #{tpu_custom_call.1} parent=63 // pred_fallthru
          _
      $region64: #{tpu_custom_call.1} parent=5 // pred_fallthru
        _
    $region6: #{tpu_custom_call.1} parent=1 // loop_footer
      %s22 = sadd.s32 1, %s18
    $region7: #{tpu_custom_call.1} parent=1 // loop_footer_branch
      %17 = sbr.rel target = $region3
    $region8: #{tpu_custom_call.1} parent=1 // loop_exit
      _
    %641 = vsyncpa [#allocation3], 1
    %s642 = scalar_lea.sflag [#allocation3], 1
    %643 = vsyncpa %s642, 1
    %644 = vsyncpa [#allocation6], 1
    %645 = vsyncpa [#allocation4], 1
    %s646 = scalar_lea.sflag [#allocation4], 1
    %647 = vsyncpa %s646, 1

</llo_original>
